<compile_context>
chip_gen: v7x
topology: tpu7x:2x2x1
jax: 0.10.0
libtpu: 0.0.40
codegen_flags: <defaults>
</compile_context>

<pallas_src>
import functools

import jax
import jax.numpy as jnp
from jax.experimental import pallas as pl
from jax.experimental.pallas import tpu as pltpu

_LANE = 128
_SUBLANE = 8
_MAX_BN = 2048            # cap on batch rows folded per grid step


def _round_up(x: int, m: int) -> int:
    return ((x + m - 1) // m) * m


@functools.lru_cache(maxsize=1)
def _tpu_generation() -> int:
    """Best-effort TPU generation (5/6/7...); 0 if unknown."""
    try:
        kind = jax.devices()[0].device_kind.lower()
    except Exception:
        return 0
    for g in (7, 6, 5, 4):
        if f"v{g}" in kind:
            return g
    return 0


def _make_mean_kernel(n_total: int, bn: int, acc_rows: int):
    inv_n = 1.0 / float(n_total)
    needs_mask = (n_total % bn) != 0      # only the last batch block is ragged

    def fold(xb):
        # (bn, F) f32 -> (acc_rows, F) f32.  When acc_rows == 8 this is pure
        # VALU slab adds (no per-step cross-sublane XLU reduce).
        if acc_rows == 1:
            return jnp.sum(xb, axis=0, keepdims=True)
        if bn == acc_rows:
            return xb
        return jnp.sum(xb.reshape(bn // acc_rows, acc_rows, xb.shape[-1]), axis=0)

    def mean_kernel(x_ref, o_ref, acc_ref):
        b = pl.program_id(1)                  # reduction (batch) axis — last
        b_last = pl.num_programs(1) - 1
        xb = x_ref[...].astype(jnp.float32)   # cast after load (native-dtype DMA)

        @pl.when(b == 0)
        def _init():
            acc_ref[...] = jnp.zeros_like(acc_ref)

        @pl.when(b < b_last)
        def _accumulate():                    # steady state: unmasked VALU adds
            acc_ref[...] += fold(xb)

        @pl.when(b == b_last)
        def _finalize():
            xm = xb
            if needs_mask:                    # ragged rows only on the last block
                row = jax.lax.broadcasted_iota(jnp.int32, (bn, 1), 0)
                xm = jnp.where(b * bn + row < n_total, xb, 0.0)
            total = acc_ref[...] + fold(xm)
            if acc_rows > 1:                  # single 8 -> 1 sublane (XLU) reduce
                total = jnp.sum(total, axis=0, keepdims=True)
            # One output write: final partial sum + 1/N scale fused in.
            o_ref[...] = (total * inv_n).astype(o_ref.dtype)

    return mean_kernel


@jax.jit
def mean_identity_mapping(x):
    """Pallas TPU implementation of torch.mean(x, dim=0)."""
    n = x.shape[0]
    rest = x.shape[1:]
    f = 1
    for d in rest:
        f *= d

    # torch.mean requires a floating dtype; we promote the *output* instead of
    # rewriting the whole input in HBM (the kernel casts after the VMEM load).
    # TODO(synk): torch.mean raises on integer inputs; we promote instead.
    out_dtype = x.dtype if jnp.issubdtype(x.dtype, jnp.floating) else jnp.float32
    itemsize = jnp.dtype(x.dtype).itemsize

    # ---- generation-aware sizing --------------------------------------------
    gen = _tpu_generation()
    if gen >= 7:            # v7x: 64 MiB VMEM/TC, 2 TCs, ~3.2 TB/s HBM
        max_f_tile = 64 * 1024
        target_block_bytes = 8 << 20
        vmem_limit = 48 << 20
    else:                   # v5e / v6e: 128 MiB VMEM, single TC
        max_f_tile = 128 * 1024
        target_block_bytes = 16 << 20
        vmem_limit = 64 << 20

    xf = x.reshape(n, f)

    # ---- feature (lane) tiling: avoid padding the input ---------------------
    pad_cols = 0
    if f <= max_f_tile:
        f_tile = f                  # full-dim block: legal even if f % 128 != 0
    else:
        f_tile = max_f_tile
        if f % _LANE != 0:
            # Rare fallback: huge, non-128-aligned feature axis.
            pad_cols = _round_up(f, _LANE) - f

    # v7x: give the parallel feature axis >= 2 tiles so both TensorCores
    # stream HBM.  No-op on v5e/v6e (single TensorCore).
    if gen >= 7 and f_tile == f and f >= 2 * _LANE:
        f_tile = _round_up((f + 1) // 2, _LANE)

    if pad_cols:
        xf = jnp.pad(xf, ((0, 0), (0, pad_cols)))
    f_work = f + pad_cols
    grid_t = pl.cdiv(f_work, f_tile)

    # ---- batch folding (reduction axis, last in grid) ------------------------
    if n <= _SUBLANE:
        bn = n                      # single block; bn == full batch dim
    else:
        want_rows = max(_SUBLANE, target_block_bytes // (itemsize * f_tile))
        bn = min(_round_up(want_rows, _SUBLANE), (n // _SUBLANE) * _SUBLANE, _MAX_BN)
    grid_n = pl.cdiv(n, bn)
    acc_rows = _SUBLANE if bn % _SUBLANE == 0 else 1

    # Small blocks + many steps: deepen input pipelining.
    in_spec_kwargs = {}
    if bn * f_tile * itemsize <= (2 << 20) and grid_n > 2:
        in_spec_kwargs["pipeline_mode"] = pl.Buffered(3)

    out2d = pl.pallas_call(
        _make_mean_kernel(n, bn, acc_rows),
        out_shape=jax.ShapeDtypeStruct((1, f_work), out_dtype),
        grid_spec=pltpu.PrefetchScalarGridSpec(
            num_scalar_prefetch=0,
            grid=(grid_t, grid_n),   # (parallel feature tiles, batch reduction)
            in_specs=[pl.BlockSpec((bn, f_tile), lambda t, b: (b, t),
                                   **in_spec_kwargs)],
            out_specs=pl.BlockSpec((1, f_tile), lambda t, b: (0, t)),
            scratch_shapes=[pltpu.VMEM((acc_rows, f_tile), jnp.float32)],
        ),
        compiler_params=pltpu.CompilerParams(
            dimension_semantics=("parallel", "arbitrary"),
            vmem_limit_bytes=vmem_limit,
        ),
    )(xf)

    return out2d[0, :f].reshape(rest)


if __name__ == "__main__":
    # Primary test: NCHW feature maps, reduce over the batch axis.
    x = jax.random.normal(jax.random.PRNGKey(0), (2, 4, 16, 16), dtype=jnp.float32)
    out = jax.block_until_ready(mean_identity_mapping(x))
    ref = jnp.mean(x, axis=0)
    assert out.shape == ref.shape == (4, 16, 16)
    assert out.dtype == ref.dtype
    assert jnp.allclose(out, ref, atol=1e-6, rtol=1e-6)

    # Secondary test: batch folding (bn = 8), ragged batch edge (N % bn != 0)
    # and a non-128-multiple feature axis (C*H*W = 105) with NO input padding.
    x2 = jax.random.normal(jax.random.PRNGKey(1), (10, 3, 5, 7), dtype=jnp.float32)
    out2 = jax.block_until_ready(mean_identity_mapping(x2))
    ref2 = jnp.mean(x2, axis=0)
    assert out2.shape == ref2.shape == (3, 5, 7)
    assert jnp.allclose(out2, ref2, atol=1e-5, rtol=1e-5)

    print("KERNEL_OK")
</pallas_src>

<mosaic_0001>
module attributes {stable_mosaic.version = 11 : i64} {
  func.func @mean_kernel(%arg0: i32, %arg1: i32, %arg2: memref<2x1024xf32, #tpu.memory_space<vmem>>, %arg3: memref<1x1024xf32, #tpu.memory_space<vmem>>, %arg4: memref<1x1024xf32, #tpu.memory_space<vmem>>) attributes {dimension_semantics = [#tpu.dimension_semantics<parallel>, #tpu.dimension_semantics<arbitrary>], iteration_bounds = array<i64: 1, 1>, scalar_prefetch = 0 : i64, scratch_operands = 1 : i64, tpu.core_type = #tpu.core_type<tc>, window_params = [{transform_indices = @transform_0, window_bounds = array<i64: 2, 1024>}, {transform_indices = @transform_1, window_bounds = array<i64: 1, 1024>}]} {
    %c0 = arith.constant 0 : index
    %c0_0 = arith.constant 0 : index
    %0 = vector.load %arg2[%c0, %c0_0] : memref<2x1024xf32, #tpu.memory_space<vmem>>, vector<2x1024xf32>
    %c0_i32 = arith.constant 0 : i32
    %1 = arith.cmpi eq, %arg1, %c0_i32 : i32
    %2 = arith.extui %1 : i1 to i32
    %c0_i32_1 = arith.constant 0 : i32
    %3 = arith.cmpi ne, %2, %c0_i32_1 : i32
    scf.if %3 {
      %cst = arith.constant 0.000000e+00 : f32
      %10 = vector.broadcast %cst : f32 to vector<1x1024xf32>
      %c0_6 = arith.constant 0 : index
      %c0_7 = arith.constant 0 : index
      %11 = vector.load %arg4[%c0_6, %c0_7] : memref<1x1024xf32, #tpu.memory_space<vmem>>, vector<1x1024xf32>
      tpu.vector_store %arg4[%c0_6, %c0_7], %10 {strides = array<i32>} : memref<1x1024xf32, #tpu.memory_space<vmem>>, vector<1x1024xf32>,
    } else {
    }
    %c0_i32_2 = arith.constant 0 : i32
    %4 = arith.cmpi slt, %arg1, %c0_i32_2 : i32
    %5 = arith.extui %4 : i1 to i32
    %c0_i32_3 = arith.constant 0 : i32
    %6 = arith.cmpi ne, %5, %c0_i32_3 : i32
    scf.if %6 {
      %c0_6 = arith.constant 0 : index
      %c0_7 = arith.constant 0 : index
      %10 = vector.load %arg4[%c0_6, %c0_7] : memref<1x1024xf32, #tpu.memory_space<vmem>>, vector<1x1024xf32>
      %cst = arith.constant dense<0.000000e+00> : vector<1024xf32>
      %11 = vector.multi_reduction <add>, %0, %cst [0] : vector<2x1024xf32> to vector<1024xf32>
      %12 = vector.shape_cast %11 : vector<1024xf32> to vector<1x1024xf32>
      %13 = arith.addf %10, %12 : vector<1x1024xf32>
      %c0_8 = arith.constant 0 : index
      %c0_9 = arith.constant 0 : index
      %14 = vector.load %arg4[%c0_8, %c0_9] : memref<1x1024xf32, #tpu.memory_space<vmem>>, vector<1x1024xf32>
      tpu.vector_store %arg4[%c0_8, %c0_9], %13 {strides = array<i32>} : memref<1x1024xf32, #tpu.memory_space<vmem>>, vector<1x1024xf32>,
    } else {
    }
    %c0_i32_4 = arith.constant 0 : i32
    %7 = arith.cmpi eq, %arg1, %c0_i32_4 : i32
    %8 = arith.extui %7 : i1 to i32
    %c0_i32_5 = arith.constant 0 : i32
    %9 = arith.cmpi ne, %8, %c0_i32_5 : i32
    scf.if %9 {
      %c0_6 = arith.constant 0 : index
      %c0_7 = arith.constant 0 : index
      %10 = vector.load %arg4[%c0_6, %c0_7] : memref<1x1024xf32, #tpu.memory_space<vmem>>, vector<1x1024xf32>
      %cst = arith.constant dense<0.000000e+00> : vector<1024xf32>
      %11 = vector.multi_reduction <add>, %0, %cst [0] : vector<2x1024xf32> to vector<1024xf32>
      %12 = vector.shape_cast %11 : vector<1024xf32> to vector<1x1024xf32>
      %13 = arith.addf %10, %12 : vector<1x1024xf32>
      %cst_8 = arith.constant 5.000000e-01 : f32
      %14 = vector.broadcast %cst_8 : f32 to vector<1x1024xf32>
      %15 = arith.mulf %13, %14 : vector<1x1024xf32>
      %c0_9 = arith.constant 0 : index
      %c0_10 = arith.constant 0 : index
      %16 = vector.load %arg3[%c0_9, %c0_10] : memref<1x1024xf32, #tpu.memory_space<vmem>>, vector<1x1024xf32>
      tpu.vector_store %arg3[%c0_9, %c0_10], %15 {strides = array<i32>} : memref<1x1024xf32, #tpu.memory_space<vmem>>, vector<1x1024xf32>,
    } else {
    }
    return
  }
  func.func @transform_0(%arg0: i32, %arg1: i32) -> (i32, i32) {
    %c0_i32 = arith.constant 0 : i32
    return %arg1, %arg0 : i32, i32
  }
  func.func @transform_1(%arg0: i32, %arg1: i32) -> (i32, i32) {
    %c0_i32 = arith.constant 0 : i32
    %c0_i32_0 = arith.constant 0 : i32
    return %c0_i32, %arg0 : i32, i32
  }
}

</mosaic_0001>

<llo_original>
// kernel: squeeze.1
$region0: #{squeeze.1}
  %s0 = inlined_call_operand.vmem [shape: f32[1024], index: 0, kind: input, shape index: {}]
  %s1 = inlined_call_operand.hbm [shape: f32[4,16,16], index: 1, kind: output, shape index: {}]
  $region1: #{squeeze.1} parent=0
    #allocation0 [shape = 'u8[32768]{0}', space=vmem, size = 0x8000, scoped, tag = 'operand span for operand 1']
    #allocation1 [shape = 's32[1]{0}', space=sflag, size = 0x4, scoped, tag = 'scoped memory for squeeze.1']
    %2 = vsyncpa [#allocation1], 0
    %v3 = vld [vmem:[%s0] sm:$0xff]
    %vm4 = vcmask 130048
    %5 = vst.msk [vmem:[#allocation0] ss:$8 sm:$0xf] %vm4, %v3
    %6 = vst.msk [vmem:[#allocation0] ss:$8 sm:$0xf0] %vm4, %v3
    %v7 = vld [vmem:[%s0] sm:$0xff]
    %8 = vrot.lane.b32.xlu0 %v7, 112
    %v9 = vpop.permute.xlu0 %8
    %vm10 = vcmask 130048
    %s11 = scalar_lea.vmem [#allocation0], 1
    %12 = vst.msk [vmem:[%s11] ss:$8 sm:$0xf] %vm10, %v9
    %s13 = scalar_lea.vmem [#allocation0], 1
    %14 = vst.msk [vmem:[%s13] ss:$8 sm:$0xf0] %vm10, %v9
    %v15 = vld [vmem:[%s0] sm:$0xff]
    %16 = vrot.lane.b32.xlu0 %v15, 96
    %v17 = vpop.permute.xlu0 %16
    %vm18 = vcmask 130048
    %s19 = scalar_lea.vmem [#allocation0], 2
    %20 = vst.msk [vmem:[%s19] ss:$8 sm:$0xf] %vm18, %v17
    %s21 = scalar_lea.vmem [#allocation0], 2
    %22 = vst.msk [vmem:[%s21] ss:$8 sm:$0xf0] %vm18, %v17
    %v23 = vld [vmem:[%s0] sm:$0xff]
    %24 = vrot.lane.b32.xlu0 %v23, 80
    %v25 = vpop.permute.xlu0 %24
    %vm26 = vcmask 130048
    %s27 = scalar_lea.vmem [#allocation0], 3
    %28 = vst.msk [vmem:[%s27] ss:$8 sm:$0xf] %vm26, %v25
    %s29 = scalar_lea.vmem [#allocation0], 3
    %30 = vst.msk [vmem:[%s29] ss:$8 sm:$0xf0] %vm26, %v25
    %v31 = vld [vmem:[%s0] sm:$0xff]
    %32 = vrot.lane.b32.xlu0 %v31, 64
    %v33 = vpop.permute.xlu0 %32
    %vm34 = vcmask 130048
    %s35 = scalar_lea.vmem [#allocation0], 4
    %36 = vst.msk [vmem:[%s35] ss:$8 sm:$0xf] %vm34, %v33
    %s37 = scalar_lea.vmem [#allocation0], 4
    %38 = vst.msk [vmem:[%s37] ss:$8 sm:$0xf0] %vm34, %v33
    %v39 = vld [vmem:[%s0] sm:$0xff]
    %40 = vrot.lane.b32.xlu0 %v39, 48
    %v41 = vpop.permute.xlu0 %40
    %vm42 = vcmask 130048
    %s43 = scalar_lea.vmem [#allocation0], 5
    %44 = vst.msk [vmem:[%s43] ss:$8 sm:$0xf] %vm42, %v41
    %s45 = scalar_lea.vmem [#allocation0], 5
    %46 = vst.msk [vmem:[%s45] ss:$8 sm:$0xf0] %vm42, %v41
    %v47 = vld [vmem:[%s0] sm:$0xff]
    %48 = vrot.lane.b32.xlu0 %v47, 32
    %v49 = vpop.permute.xlu0 %48
    %vm50 = vcmask 130048
    %s51 = scalar_lea.vmem [#allocation0], 6
    %52 = vst.msk [vmem:[%s51] ss:$8 sm:$0xf] %vm50, %v49
    %s53 = scalar_lea.vmem [#allocation0], 6
    %54 = vst.msk [vmem:[%s53] ss:$8 sm:$0xf0] %vm50, %v49
    %v55 = vld [vmem:[%s0] sm:$0xff]
    %56 = vrot.lane.b32.xlu0 %v55, 16
    %v57 = vpop.permute.xlu0 %56
    %vm58 = vcmask 130048
    %s59 = scalar_lea.vmem [#allocation0], 7
    %60 = vst.msk [vmem:[%s59] ss:$8 sm:$0xf] %vm58, %v57
    %s61 = scalar_lea.vmem [#allocation0], 7
    %62 = vst.msk [vmem:[%s61] ss:$8 sm:$0xf0] %vm58, %v57
    %s64 = ssub.s32 1024, 1024
    %65 = vsyncadd [#allocation1], %s64
    %s67 = sshll.u32 [#allocation0], 4
    %s68 = int_to_ptr.vmem [resolvable:$true] %s67
    %70 = dma.vmem_to_hbm [thread:$0]  %s68, 1024, %s1, [#allocation1]
    %71 = dma.done [#allocation1], 1024
    %72 = vsyncpa [#allocation1], 1

// kernel: mean_identity_mapping.1
$region0: #{mean_identity_mapping.1}
  #allocation0 [shape = 'u32[]', space=smem, size = 0x4, offset = 0x4, fixed_abs, tag = 'smem constant byte address 0x4 - core index']
  #allocation1 [shape = 'u32[144,128]{1,0:T(1,128)}', space=vmem, size = 0x12000, scoped, tag = 'internal scratch']
  #allocation2 [shape = 'f32[1,1024]{1,0:T(1,128)}', space=vmem, size = 0x1000, scoped, tag = 'scratch operand']
  %s0 = inlined_call_operand.hbm [shape: f32[2,1024], index: 0, kind: input, shape index: {}]
  %s1 = inlined_call_operand.hbm [shape: f32[1,1024], index: 1, kind: output, shape index: {}]
  %s2 = sld [smem:[#allocation0]]
  $region30: #{mean_identity_mapping.1} parent=0
    _
  %s4 = ssub.s32 1, %s2
  %s5 = scalar_select 0, %s4, %s2
  $region1: #{mean_identity_mapping.1} parent=0
    #allocation3 [shape = 'u8[8192]{0}', space=vmem, size = 0x2000, scoped, tag = 'input window, operand 0, single buffered']
    #allocation4 [shape = 's32[1]{0}', space=sflag, size = 0x4, scoped, tag = 'scoped memory for mean_identity_mapping.1']
    #allocation5 [shape = 's32[1]{0}', space=sflag, size = 0x4, scoped, tag = 'scoped memory for mean_identity_mapping.1']
    #allocation6 [shape = 'u8[4096]{0}', space=vmem, size = 0x1000, scoped, tag = 'output window, operand 0, single buffered']
    %6 = vsyncpa [#allocation4], 0
    %7 = vsyncpa [#allocation5], 0
    // Predicated region
    $region2: #{mean_identity_mapping.1} parent=1 // pred_check
      _
    $region3: #{mean_identity_mapping.1} parent=1 // pred_check_branch
      %9 = sbr.rel (0) target = $region5
    $region4: #{mean_identity_mapping.1} parent=1 // pred_region
      %s11 = ssub.s32 256, 256
      %12 = vsyncadd [#allocation4], %s11
      %s14 = sshll.u32 [#allocation3], 4
      %s15 = int_to_ptr.vmem [resolvable:$true] %s14
      %17 = dma.hbm_to_vmem [thread:$0]  %s0, 256, %s15, [#allocation4]
    $region5: #{mean_identity_mapping.1} parent=1 // pred_fallthru
      _
    // Predicated region
    $region6: #{mean_identity_mapping.1} parent=1 // pred_check
      _
    $region7: #{mean_identity_mapping.1} parent=1 // pred_check_branch
      %19 = sbr.rel (0) target = $region9
    $region8: #{mean_identity_mapping.1} parent=1 // pred_region
      %20 = dma.done [#allocation4], 256
    $region9: #{mean_identity_mapping.1} parent=1 // pred_fallthru
      _
    %v21 = vld [vmem:[#allocation3] sm:$0xff]
    %v22 = vld [vmem:[#allocation3 + $0x8] sm:$0xff]
    %p23 = scmp.eq.s32.totalorder 0, 0
    // Predicated region
    $region10: #{mean_identity_mapping.1} parent=1 // pred_check
      %p24 = pneg %p23
    $region11: #{mean_identity_mapping.1} parent=1 // pred_check_branch
      %26 = sbr.rel (%p24) target = $region13
    $region12: #{mean_identity_mapping.1} parent=1 // pred_region
      %27 = vst [vmem:[#allocation2] sm:$0xff] 0.0
    $region13: #{mean_identity_mapping.1} parent=1 // pred_fallthru
      _
    %p28 = scmp.lt.s32.totalorder 0, 0
    // Predicated region
    $region14: #{mean_identity_mapping.1} parent=1 // pred_check
      %p29 = pneg %p28
    $region15: #{mean_identity_mapping.1} parent=1 // pred_check_branch
      %31 = sbr.rel (%p29) target = $region17
    $region16: #{mean_identity_mapping.1} parent=1 // pred_region
      %v32 = vld [vmem:[#allocation2] sm:$0xff]
      %v35 = vcombine.high %v21, %v21
      %v37 = vunpack.c.l.s4 1983009808
      %v38 = vunpack.c.0.s8 %v37
      %v39 = vlaneseq
      %v40 = vshrl.u32 %v39, 7
      %v41 = vsub.s32 %v38, %v40
      %v42 = vrot.slane %v21, %v41
      %v44 = vunpack.c.l.s4 1983009808
      %v45 = vunpack.c.0.s8 %v44
      %v46 = vlaneseq
      %v47 = vshrl.u32 %v46, 7
      %v48 = vsub.s32 %v45, %v47
      %v49 = vrot.slane %v35, %v48
      %v50 = vcombine.high %v42, %v42
      %v51 = vcombine.high %v49, %v49
      %v52 = vcombine.high %v22, %v22
      %v54 = vunpack.c.l.s4 1983009808
      %v55 = vunpack.c.0.s8 %v54
      %v56 = vlaneseq
      %v57 = vshrl.u32 %v56, 7
      %v58 = vsub.s32 %v55, %v57
      %v59 = vrot.slane %v22, %v58
      %v61 = vunpack.c.l.s4 1983009808
      %v62 = vunpack.c.0.s8 %v61
      %v63 = vlaneseq
      %v64 = vshrl.u32 %v63, 7
      %v65 = vsub.s32 %v62, %v64
      %v66 = vrot.slane %v52, %v65
      %v67 = vcombine.high %v59, %v59
      %v68 = vcombine.high %v66, %v66
      %vm77 = vcmask 1041408
      %v78 = vsel %vm77, %v42, 0.0
      %v79 = vrot.slane %v78, 4
      %v80 = vadd.f32 %v78, %v79
      %v81 = vrot.slane %v80, 2
      %v82 = vadd.f32 %v80, %v81
      %v83 = vrot.slane %v82, 1
      %v84 = vadd.f32 %v82, %v83
      %v85 = vsel %vm77, %v50, 0.0
      %v86 = vrot.slane %v85, 4
      %v87 = vadd.f32 %v85, %v86
      %v88 = vrot.slane %v87, 2
      %v89 = vadd.f32 %v87, %v88
      %v90 = vrot.slane %v89, 1
      %v91 = vadd.f32 %v89, %v90
      %v92 = vsel %vm77, %v49, 0.0
      %v93 = vrot.slane %v92, 4
      %v94 = vadd.f32 %v92, %v93
      %v95 = vrot.slane %v94, 2
      %v96 = vadd.f32 %v94, %v95
      %v97 = vrot.slane %v96, 1
      %v98 = vadd.f32 %v96, %v97
      %v99 = vsel %vm77, %v51, 0.0
      %v100 = vrot.slane %v99, 4
      %v101 = vadd.f32 %v99, %v100
      %v102 = vrot.slane %v101, 2
      %v103 = vadd.f32 %v101, %v102
      %v104 = vrot.slane %v103, 1
      %v105 = vadd.f32 %v103, %v104
      %v106 = vsel %vm77, %v59, 0.0
      %v107 = vrot.slane %v106, 4
      %v108 = vadd.f32 %v106, %v107
      %v109 = vrot.slane %v108, 2
      %v110 = vadd.f32 %v108, %v109
      %v111 = vrot.slane %v110, 1
      %v112 = vadd.f32 %v110, %v111
      %v113 = vsel %vm77, %v67, 0.0
      %v114 = vrot.slane %v113, 4
      %v115 = vadd.f32 %v113, %v114
      %v116 = vrot.slane %v115, 2
      %v117 = vadd.f32 %v115, %v116
      %v118 = vrot.slane %v117, 1
      %v119 = vadd.f32 %v117, %v118
      %v120 = vsel %vm77, %v66, 0.0
      %v121 = vrot.slane %v120, 4
      %v122 = vadd.f32 %v120, %v121
      %v123 = vrot.slane %v122, 2
      %v124 = vadd.f32 %v122, %v123
      %v125 = vrot.slane %v124, 1
      %v126 = vadd.f32 %v124, %v125
      %v127 = vsel %vm77, %v68, 0.0
      %v128 = vrot.slane %v127, 4
      %v129 = vadd.f32 %v127, %v128
      %v130 = vrot.slane %v129, 2
      %v131 = vadd.f32 %v129, %v130
      %v132 = vrot.slane %v131, 1
      %v133 = vadd.f32 %v131, %v132
      %v142 = vcombine.low %v84, %v91
      %v143 = vcombine.low %v98, %v105
      %v144 = vcombine.low %v112, %v119
      %v145 = vcombine.low %v126, %v133
      %v147 = vunpack.c.l.s4 1966171168
      %v148 = vunpack.c.0.s8 %v147
      %v149 = vlaneseq
      %v150 = vshrl.u32 %v149, 7
      %v151 = vsub.s32 %v148, %v150
      %v152 = vrot.slane %v142, %v151
      %v154 = vunpack.c.l.s4 1966171168
      %v155 = vunpack.c.0.s8 %v154
      %v156 = vlaneseq
      %v157 = vshrl.u32 %v156, 7
      %v158 = vsub.s32 %v155, %v157
      %v159 = vrot.slane %v143, %v158
      %v161 = vunpack.c.l.s4 1966171168
      %v162 = vunpack.c.0.s8 %v161
      %v163 = vlaneseq
      %v164 = vshrl.u32 %v163, 7
      %v165 = vsub.s32 %v162, %v164
      %v166 = vrot.slane %v144, %v165
      %v168 = vunpack.c.l.s4 1966171168
      %v169 = vunpack.c.0.s8 %v168
      %v170 = vlaneseq
      %v171 = vshrl.u32 %v170, 7
      %v172 = vsub.s32 %v169, %v171
      %v173 = vrot.slane %v145, %v172
      %v174 = vcombine.low %v152, %v159
      %v175 = vcombine.low %v166, %v173
      %v177 = vunpack.c.l.s4 1966171168
      %v178 = vunpack.c.0.s8 %v177
      %v179 = vlaneseq
      %v180 = vshrl.u32 %v179, 7
      %v181 = vsub.s32 %v178, %v180
      %v182 = vrot.slane %v174, %v181
      %v184 = vunpack.c.l.s4 1966171168
      %v185 = vunpack.c.0.s8 %v184
      %v186 = vlaneseq
      %v187 = vshrl.u32 %v186, 7
      %v188 = vsub.s32 %v185, %v187
      %v189 = vrot.slane %v175, %v188
      %v190 = vcombine.low %v182, %v189
      %v192 = vadd.f32 %v32, %v190
      %193 = vst [vmem:[#allocation2] sm:$0xff] %v192
    $region17: #{mean_identity_mapping.1} parent=1 // pred_fallthru
      _
    // Predicated region
    $region18: #{mean_identity_mapping.1} parent=1 // pred_check
      %p194 = pneg %p23
    $region19: #{mean_identity_mapping.1} parent=1 // pred_check_branch
      %196 = sbr.rel (%p194) target = $region21
    $region20: #{mean_identity_mapping.1} parent=1 // pred_region
      %v197 = vld [vmem:[#allocation2] sm:$0xff]
      %v200 = vcombine.high %v21, %v21
      %v202 = vunpack.c.l.s4 1983009808
      %v203 = vunpack.c.0.s8 %v202
      %v204 = vlaneseq
      %v205 = vshrl.u32 %v204, 7
      %v206 = vsub.s32 %v203, %v205
      %v207 = vrot.slane %v21, %v206
      %v209 = vunpack.c.l.s4 1983009808
      %v210 = vunpack.c.0.s8 %v209
      %v211 = vlaneseq
      %v212 = vshrl.u32 %v211, 7
      %v213 = vsub.s32 %v210, %v212
      %v214 = vrot.slane %v200, %v213
      %v215 = vcombine.high %v207, %v207
      %v216 = vcombine.high %v214, %v214
      %v217 = vcombine.high %v22, %v22
      %v219 = vunpack.c.l.s4 1983009808
      %v220 = vunpack.c.0.s8 %v219
      %v221 = vlaneseq
      %v222 = vshrl.u32 %v221, 7
      %v223 = vsub.s32 %v220, %v222
      %v224 = vrot.slane %v22, %v223
      %v226 = vunpack.c.l.s4 1983009808
      %v227 = vunpack.c.0.s8 %v226
      %v228 = vlaneseq
      %v229 = vshrl.u32 %v228, 7
      %v230 = vsub.s32 %v227, %v229
      %v231 = vrot.slane %v217, %v230
      %v232 = vcombine.high %v224, %v224
      %v233 = vcombine.high %v231, %v231
      %vm242 = vcmask 1041408
      %v243 = vsel %vm242, %v207, 0.0
      %v244 = vrot.slane %v243, 4
      %v245 = vadd.f32 %v243, %v244
      %v246 = vrot.slane %v245, 2
      %v247 = vadd.f32 %v245, %v246
      %v248 = vrot.slane %v247, 1
      %v249 = vadd.f32 %v247, %v248
      %v250 = vsel %vm242, %v215, 0.0
      %v251 = vrot.slane %v250, 4
      %v252 = vadd.f32 %v250, %v251
      %v253 = vrot.slane %v252, 2
      %v254 = vadd.f32 %v252, %v253
      %v255 = vrot.slane %v254, 1
      %v256 = vadd.f32 %v254, %v255
      %v257 = vsel %vm242, %v214, 0.0
      %v258 = vrot.slane %v257, 4
      %v259 = vadd.f32 %v257, %v258
      %v260 = vrot.slane %v259, 2
      %v261 = vadd.f32 %v259, %v260
      %v262 = vrot.slane %v261, 1
      %v263 = vadd.f32 %v261, %v262
      %v264 = vsel %vm242, %v216, 0.0
      %v265 = vrot.slane %v264, 4
      %v266 = vadd.f32 %v264, %v265
      %v267 = vrot.slane %v266, 2
      %v268 = vadd.f32 %v266, %v267
      %v269 = vrot.slane %v268, 1
      %v270 = vadd.f32 %v268, %v269
      %v271 = vsel %vm242, %v224, 0.0
      %v272 = vrot.slane %v271, 4
      %v273 = vadd.f32 %v271, %v272
      %v274 = vrot.slane %v273, 2
      %v275 = vadd.f32 %v273, %v274
      %v276 = vrot.slane %v275, 1
      %v277 = vadd.f32 %v275, %v276
      %v278 = vsel %vm242, %v232, 0.0
      %v279 = vrot.slane %v278, 4
      %v280 = vadd.f32 %v278, %v279
      %v281 = vrot.slane %v280, 2
      %v282 = vadd.f32 %v280, %v281
      %v283 = vrot.slane %v282, 1
      %v284 = vadd.f32 %v282, %v283
      %v285 = vsel %vm242, %v231, 0.0
      %v286 = vrot.slane %v285, 4
      %v287 = vadd.f32 %v285, %v286
      %v288 = vrot.slane %v287, 2
      %v289 = vadd.f32 %v287, %v288
      %v290 = vrot.slane %v289, 1
      %v291 = vadd.f32 %v289, %v290
      %v292 = vsel %vm242, %v233, 0.0
      %v293 = vrot.slane %v292, 4
      %v294 = vadd.f32 %v292, %v293
      %v295 = vrot.slane %v294, 2
      %v296 = vadd.f32 %v294, %v295
      %v297 = vrot.slane %v296, 1
      %v298 = vadd.f32 %v296, %v297
      %v307 = vcombine.low %v249, %v256
      %v308 = vcombine.low %v263, %v270
      %v309 = vcombine.low %v277, %v284
      %v310 = vcombine.low %v291, %v298
      %v312 = vunpack.c.l.s4 1966171168
      %v313 = vunpack.c.0.s8 %v312
      %v314 = vlaneseq
      %v315 = vshrl.u32 %v314, 7
      %v316 = vsub.s32 %v313, %v315
      %v317 = vrot.slane %v307, %v316
      %v319 = vunpack.c.l.s4 1966171168
      %v320 = vunpack.c.0.s8 %v319
      %v321 = vlaneseq
      %v322 = vshrl.u32 %v321, 7
      %v323 = vsub.s32 %v320, %v322
      %v324 = vrot.slane %v308, %v323
      %v326 = vunpack.c.l.s4 1966171168
      %v327 = vunpack.c.0.s8 %v326
      %v328 = vlaneseq
      %v329 = vshrl.u32 %v328, 7
      %v330 = vsub.s32 %v327, %v329
      %v331 = vrot.slane %v309, %v330
      %v333 = vunpack.c.l.s4 1966171168
      %v334 = vunpack.c.0.s8 %v333
      %v335 = vlaneseq
      %v336 = vshrl.u32 %v335, 7
      %v337 = vsub.s32 %v334, %v336
      %v338 = vrot.slane %v310, %v337
      %v339 = vcombine.low %v317, %v324
      %v340 = vcombine.low %v331, %v338
      %v342 = vunpack.c.l.s4 1966171168
      %v343 = vunpack.c.0.s8 %v342
      %v344 = vlaneseq
      %v345 = vshrl.u32 %v344, 7
      %v346 = vsub.s32 %v343, %v345
      %v347 = vrot.slane %v339, %v346
      %v349 = vunpack.c.l.s4 1966171168
      %v350 = vunpack.c.0.s8 %v349
      %v351 = vlaneseq
      %v352 = vshrl.u32 %v351, 7
      %v353 = vsub.s32 %v350, %v352
      %v354 = vrot.slane %v340, %v353
      %v355 = vcombine.low %v347, %v354
      %v357 = vadd.f32 %v197, %v355
      %v358 = vmul.f32 %v357, 0.5
      %359 = vst [vmem:[#allocation6] sm:$0xff] %v358
    $region21: #{mean_identity_mapping.1} parent=1 // pred_fallthru
      _
    // Predicated region
    $region22: #{mean_identity_mapping.1} parent=1 // pred_check
      _
    $region23: #{mean_identity_mapping.1} parent=1 // pred_check_branch
      %361 = sbr.rel (0) target = $region25
    $region24: #{mean_identity_mapping.1} parent=1 // pred_region
      %s363 = ssub.s32 128, 128
      %364 = vsyncadd [#allocation5], %s363
      %s366 = sshll.u32 [#allocation6], 4
      %s367 = int_to_ptr.vmem [resolvable:$true] %s366
      %369 = dma.vmem_to_hbm [thread:$0]  %s367, 128, %s1, [#allocation5]
    $region25: #{mean_identity_mapping.1} parent=1 // pred_fallthru
      _
    // Predicated region
    $region26: #{mean_identity_mapping.1} parent=1 // pred_check
      _
    $region27: #{mean_identity_mapping.1} parent=1 // pred_check_branch
      %371 = sbr.rel (0) target = $region29
    $region28: #{mean_identity_mapping.1} parent=1 // pred_region
      %372 = dma.done [#allocation5], 128
    $region29: #{mean_identity_mapping.1} parent=1 // pred_fallthru
      _
    %373 = vsyncpa [#allocation4], 1
    %374 = vsyncpa [#allocation5], 1

</llo_original>
